<compile_context>
chip_gen: v6e
topology: v6e:2x2x1
jax: 0.10.0
libtpu: 0.0.40
codegen_flags: <defaults>
</compile_context>

<pallas_src>
import jax
import jax.numpy as jnp
from jax.experimental import pallas as pl
from jax.experimental.pallas import tpu as pltpu


def _interp_matrix(n_in, n_out):
    """(n_out, n_in) bilinear interpolation matrix, align_corners=True, f32."""
    if n_out == 1:
        src = jnp.zeros((1,), dtype=jnp.float32)
    else:
        src = jnp.arange(n_out, dtype=jnp.float32) * ((n_in - 1) / (n_out - 1))
    i0 = jnp.clip(jnp.floor(src).astype(jnp.int32), 0, n_in - 1)
    i1 = jnp.clip(i0 + 1, 0, n_in - 1)
    frac = src - i0.astype(jnp.float32)
    cols = jnp.arange(n_in)
    w0 = (cols[None, :] == i0[:, None]).astype(jnp.float32) * (1.0 - frac)[:, None]
    w1 = (cols[None, :] == i1[:, None]).astype(jnp.float32) * frac[:, None]
    return w0 + w1


def _upsample_kernel(wy_ref, wxt_ref, x_ref, o_ref):
    # wy_ref: (Hout, H) f32, wxt_ref: (W, Wout) f32
    # x_ref:  (TB, H, W), o_ref: (TB, Hout, Wout)
    tb, h, w = x_ref.shape
    hout = wy_ref.shape[0]
    wout = wxt_ref.shape[1]

    x = x_ref[...].astype(jnp.float32)                               # (TB, H, W)

    # H-interp for all TB planes at once (batched MXU matmul, f32 accumulate).
    wy_b = jnp.broadcast_to(wy_ref[...][None, :, :], (tb, hout, h))  # (TB, Hout, H)
    y = jnp.einsum("bph,bhw->bpw", wy_b, x,
                   preferred_element_type=jnp.float32)               # (TB, Hout, W)

    # W-interp fused over the plane batch: single big-M 2-D matmul.
    y2 = y.reshape(tb * hout, w)                                     # free view when Hout % 8 == 0
    o = jnp.dot(y2, wxt_ref[...], preferred_element_type=jnp.float32)  # (TB*Hout, Wout)

    o_ref[...] = o.reshape(tb, hout, wout).astype(o_ref.dtype)


def _pick_tile_batch(nc, h, w, hout, wout, budget_bytes=12 * 1024 * 1024):
    """Largest plane-batch TB (divisor of NC) fitting a conservative VMEM budget.

    Budget (f32): double-buffered input + output tiles, the (Hout, W) intermediate
    and the broadcast H-interp matrix.  12 MiB keeps us safely below the scoped
    VMEM limit on v5e/v6e/v7x.  Prefer >=2 grid steps so v7x's two TensorCores
    can shard the (parallel) plane axis.
    """
    per_plane = 4 * (2 * h * w + 2 * hout * wout + hout * w + hout * h)
    tb_max = max(1, budget_bytes // per_plane)
    divisors = [d for d in range(1, nc + 1) if nc % d == 0 and d <= tb_max]
    multi = [d for d in divisors if nc // d >= 2]
    return max(multi) if multi else max(divisors)


def up_bilinear(x, scale_factor=2, size=None):
    """Equivalent of `up(in_ch, mode='bilinear', size=size)(x)` for NCHW x."""
    n, c, h, w = x.shape
    if size is None or size is False:
        hout, wout = h * scale_factor, w * scale_factor
    else:
        hout, wout = size
    nc = n * c

    wy = _interp_matrix(h, hout)         # (Hout, H), f32 (keep full precision weights)
    wxt = _interp_matrix(w, wout).T      # (W, Wout), f32
    xf = x.reshape(nc, h, w)             # free reshape, natural NCHW order

    tb = _pick_tile_batch(nc, h, w, hout, wout)
    grid = (nc // tb,)

    out = pl.pallas_call(
        _upsample_kernel,
        out_shape=jax.ShapeDtypeStruct((nc, hout, wout), x.dtype),
        grid_spec=pltpu.PrefetchScalarGridSpec(
            num_scalar_prefetch=0,
            grid=grid,
            in_specs=[
                pl.BlockSpec((hout, h), lambda i: (0, 0)),     # resident H-interp matrix
                pl.BlockSpec((w, wout), lambda i: (0, 0)),     # resident W-interp matrix (T)
                pl.BlockSpec((tb, h, w), lambda i: (i, 0, 0)),  # TB planes per grid step
            ],
            out_specs=pl.BlockSpec((tb, hout, wout), lambda i: (i, 0, 0)),
        ),
        compiler_params=pltpu.CompilerParams(
            dimension_semantics=("parallel",),      # independent plane batches (megacore on v7x)
            vmem_limit_bytes=32 * 1024 * 1024,      # safe on v5e/v6e (128 MiB) and v7x (64 MiB)
        ),
    )(wy, wxt, xf)
    return out.reshape(n, c, hout, wout)


if __name__ == "__main__":
    key = jax.random.PRNGKey(0)
    N, C, H, W = 2, 4, 16, 16
    x = jax.random.normal(key, (N, C, H, W), dtype=jnp.float32)

    out = up_bilinear(x)                      # (2, 4, 32, 32)
    out = jax.block_until_ready(out)

    # Pure-JAX reference of the same align_corners=True bilinear upsample.
    wy = _interp_matrix(H, 2 * H)
    wx = _interp_matrix(W, 2 * W)
    ref = jnp.einsum("ph,nchw,qw->ncpq", wy, x, wx)

    assert out.shape == (N, C, 2 * H, 2 * W)
    assert jnp.allclose(out, ref, atol=1e-5, rtol=1e-5)
    print("KERNEL_OK")
</pallas_src>

<mosaic_0001>
module attributes {stable_mosaic.version = 11 : i64} {
  func.func @_upsample_kernel(%arg0: i32, %arg1: memref<32x16xf32, #tpu.memory_space<vmem>>, %arg2: memref<16x32xf32, #tpu.memory_space<vmem>>, %arg3: memref<4x16x16xf32, #tpu.memory_space<vmem>>, %arg4: memref<4x32x32xf32, #tpu.memory_space<vmem>>) attributes {dimension_semantics = [#tpu.dimension_semantics<parallel>], iteration_bounds = array<i64: 2>, scalar_prefetch = 0 : i64, scratch_operands = 0 : i64, tpu.core_type = #tpu.core_type<tc>, window_params = [{pipeline_mode = #tpu.pipeline_mode<synchronous>, transform_indices = @transform_0, window_bounds = array<i64: 32, 16>}, {pipeline_mode = #tpu.pipeline_mode<synchronous>, transform_indices = @transform_1, window_bounds = array<i64: 16, 32>}, {transform_indices = @transform_2, window_bounds = array<i64: 4, 16, 16>}, {transform_indices = @transform_3, window_bounds = array<i64: 4, 32, 32>}]} {
    %c0 = arith.constant 0 : index
    %c0_0 = arith.constant 0 : index
    %c0_1 = arith.constant 0 : index
    %0 = vector.load %arg3[%c0, %c0_0, %c0_1] : memref<4x16x16xf32, #tpu.memory_space<vmem>>, vector<4x16x16xf32>
    %c0_2 = arith.constant 0 : index
    %c0_3 = arith.constant 0 : index
    %1 = vector.load %arg1[%c0_2, %c0_3] : memref<32x16xf32, #tpu.memory_space<vmem>>, vector<32x16xf32>
    %2 = vector.shape_cast %1 : vector<32x16xf32> to vector<1x32x16xf32>
    %3 = vector.shape_cast %2 : vector<1x32x16xf32> to vector<1x32x16xf32>
    %4 = vector.broadcast %3 : vector<1x32x16xf32> to vector<4x32x16xf32>
    "tpu.trace_start"() <{level = 10 : i32, message = "bph,bhw->bpw"}> : () -> ()
    %cst = arith.constant dense<0.000000e+00> : vector<4x32x16xf32>
    %5 = tpu.matmul %4, %0, %cst {dimension_numbers = #tpu.dot_dimension_numbers<[2], [1], [1], [2], [0, 0, 0, 1, 1, 2], [0], [0]>} : vector<4x32x16xf32>, vector<4x16x16xf32>, vector<4x32x16xf32> -> vector<4x32x16xf32>
    "tpu.trace_stop"() : () -> ()
    %6 = vector.shape_cast %5 : vector<4x32x16xf32> to vector<128x16xf32>
    %c0_4 = arith.constant 0 : index
    %c0_5 = arith.constant 0 : index
    %7 = vector.load %arg2[%c0_4, %c0_5] : memref<16x32xf32, #tpu.memory_space<vmem>>, vector<16x32xf32>
    %cst_6 = arith.constant dense<0.000000e+00> : vector<128x32xf32>
    %8 = tpu.matmul %6, %7, %cst_6 {dimension_numbers = #tpu.dot_dimension_numbers<[1], [0], [0], [1], [0, 0, 1, 1], [], []>} : vector<128x16xf32>, vector<16x32xf32>, vector<128x32xf32> -> vector<128x32xf32>
    %9 = vector.shape_cast %8 : vector<128x32xf32> to vector<4x32x32xf32>
    %c0_7 = arith.constant 0 : index
    %c0_8 = arith.constant 0 : index
    %c0_9 = arith.constant 0 : index
    %10 = vector.load %arg4[%c0_7, %c0_8, %c0_9] : memref<4x32x32xf32, #tpu.memory_space<vmem>>, vector<4x32x32xf32>
    tpu.vector_store %arg4[%c0_7, %c0_8, %c0_9], %9 {strides = array<i32>} : memref<4x32x32xf32, #tpu.memory_space<vmem>>, vector<4x32x32xf32>,
    return
  }
  func.func @transform_0(%arg0: i32) -> (i32, i32) {
    %c0_i32 = arith.constant 0 : i32
    %c0_i32_0 = arith.constant 0 : i32
    %c0_i32_1 = arith.constant 0 : i32
    return %c0_i32, %c0_i32_0 : i32, i32
  }
  func.func @transform_1(%arg0: i32) -> (i32, i32) {
    %c0_i32 = arith.constant 0 : i32
    %c0_i32_0 = arith.constant 0 : i32
    %c0_i32_1 = arith.constant 0 : i32
    return %c0_i32, %c0_i32_0 : i32, i32
  }
  func.func @transform_2(%arg0: i32) -> (i32, i32, i32) {
    %c0_i32 = arith.constant 0 : i32
    %c0_i32_0 = arith.constant 0 : i32
    %c0_i32_1 = arith.constant 0 : i32
    return %arg0, %c0_i32, %c0_i32_0 : i32, i32, i32
  }
  func.func @transform_3(%arg0: i32) -> (i32, i32, i32) {
    %c0_i32 = arith.constant 0 : i32
    %c0_i32_0 = arith.constant 0 : i32
    %c0_i32_1 = arith.constant 0 : i32
    return %arg0, %c0_i32, %c0_i32_0 : i32, i32, i32
  }
}

</mosaic_0001>

<llo_original>
// kernel: tpu_custom_call.1
$region0: #{tpu_custom_call.1}
  #allocation0 [shape = 'u32[]', space=smem, size = 0x4, offset = 0x4, fixed_abs, tag = 'smem constant byte address 0x4 - core index']
  #allocation1 [shape = 'u32[144,128]{1,0:T(1,128)}', space=vmem, size = 0x12000, scoped, tag = 'internal scratch']
  %s0 = inlined_call_operand.vmem [shape: f32[32,16], index: 0, kind: input, shape index: {}]
  %s1 = inlined_call_operand.vmem [shape: f32[16,32], index: 1, kind: input, shape index: {}]
  %s2 = inlined_call_operand.hbm [shape: f32[8,16,16], index: 2, kind: input, shape index: {}]
  %s3 = inlined_call_operand.hbm [shape: f32[8,32,32], index: 3, kind: output, shape index: {}]
  %s4 = sld [smem:[#allocation0]]
  $region49: #{tpu_custom_call.1} parent=0
    _
  %s6 = ssub.s32 1, %s4
  %s7 = scalar_select 0, %s6, %s4
  $region1: #{tpu_custom_call.1} parent=0
    #allocation2 [shape = 'u8[65536]{0}', space=vmem, size = 0x10000, scoped, tag = 'input window, operand 2']
    #allocation3 [shape = 's32[2]{0}', space=sflag, size = 0x8, scoped, tag = 'scoped memory for tpu_custom_call.1']
    #allocation4 [shape = 's32[2]{0}', space=sflag, size = 0x8, scoped, tag = 'scoped memory for tpu_custom_call.1']
    #allocation5 [shape = 'u8[131072]{0}', space=vmem, size = 0x20000, scoped, tag = 'output window, operand 0']
    %8 = vsyncpa [#allocation3], 0
    %s9 = scalar_lea.sflag [#allocation3], 1
    %10 = vsyncpa %s9, 0
    %11 = vsyncpa [#allocation4], 0
    %s12 = scalar_lea.sflag [#allocation4], 1
    %13 = vsyncpa %s12, 0
    loop: start=0, step=1, limit=4
    $region2: #{tpu_custom_call.1} parent=1 // loop_pre_header
      _
    $region3: #{tpu_custom_call.1} parent=1 // loop_header
      %s15 = sphi 0, %s19
      %p16 = scmp.ge.s32.totalorder %s15, 4
      %s23 = sphi 0, %s23
      %s25 = sphi 0, %s23
      %s26 = sphi 0, %s25
      %s40 = sphi 0, %s26
      %s44 = sphi 0, %s44
      %s46 = sphi 0, %s44
      %s47 = sphi 0, %s46
      %s61 = sphi 0, %s47
      %s67 = sphi 0, %s69
      %s70 = sphi 0, %s67
      %s71 = sphi 0, %s70
      %s87 = sphi 0, %s71
      %s93 = sphi 0, %s95
      %s96 = sphi 0, %s93
      %s97 = sphi 0, %s96
      %s113 = sphi 0, %s97
    $region4: #{tpu_custom_call.1} parent=1 // loop_header_branch
      %18 = sbr.rel (%p16) target = $region8
    $region5: #{tpu_custom_call.1} parent=1 // loop_body
      %s20 = ssub.s32 %s15, 1
      %s21 = ssub.s32 %s15, 2
      %s22 = sadd.s32 %s15, 1
      %s24 = sadd.s32 %s23, 1
      %p27 = scmp.eq.s32.totalorder %s15, 1
      %p28 = scmp.ne.s32.totalorder %s23, %s25
      %p29 = scmp.eq.s32.totalorder %s15, 0
      %p30 = por %p28, %p29
      %p31 = scmp.ne.s32.totalorder %s23, %s25
      %p32 = scmp.eq.s32.totalorder %s20, 1
      %p33 = por %p31, %p32
      %p34 = scmp.ne.s32.totalorder %s25, %s26
      %p35 = scmp.eq.s32.totalorder %s20, 0
      %p36 = por %p34, %p35
      %p37 = scmp.ne.s32.totalorder %s25, %s26
      %p38 = scmp.eq.s32.totalorder %s21, 1
      %p39 = por %p37, %p38
      %p41 = scmp.ne.s32.totalorder %s26, %s40
      %p42 = scmp.eq.s32.totalorder %s21, 0
      %p43 = por %p41, %p42
      %s45 = sadd.s32 %s44, 1
      %p48 = scmp.eq.s32.totalorder %s15, 1
      %p49 = scmp.ne.s32.totalorder %s44, %s46
      %p50 = scmp.eq.s32.totalorder %s15, 0
      %p51 = por %p49, %p50
      %p52 = scmp.ne.s32.totalorder %s44, %s46
      %p53 = scmp.eq.s32.totalorder %s20, 1
      %p54 = por %p52, %p53
      %p55 = scmp.ne.s32.totalorder %s46, %s47
      %p56 = scmp.eq.s32.totalorder %s20, 0
      %p57 = por %p55, %p56
      %p58 = scmp.ne.s32.totalorder %s46, %s47
      %p59 = scmp.eq.s32.totalorder %s21, 1
      %p60 = por %p58, %p59
      %p62 = scmp.ne.s32.totalorder %s47, %s61
      %p63 = scmp.eq.s32.totalorder %s21, 0
      %p64 = por %p62, %p63
      %s65 = ssub.s32 %s15, %s22
      %p66 = scmp.eq.s32.totalorder %s65, 0
      %s68 = sadd.s32 %s67, 1
      %s69 = scalar_select %p66, %s67, %s68
      %p72 = pneg %p66
      %p73 = scmp.eq.s32.totalorder %s15, 1
      %p74 = por %p72, %p73
      %p75 = scmp.ne.s32.totalorder %s67, %s70
      %p76 = scmp.eq.s32.totalorder %s15, 0
      %p77 = por %p75, %p76
      %p78 = scmp.ne.s32.totalorder %s67, %s70
      %p79 = scmp.eq.s32.totalorder %s20, 1
      %p80 = por %p78, %p79
      %p81 = scmp.ne.s32.totalorder %s70, %s71
      %p82 = scmp.eq.s32.totalorder %s20, 0
      %p83 = por %p81, %p82
      %p84 = scmp.ne.s32.totalorder %s70, %s71
      %p85 = scmp.eq.s32.totalorder %s21, 1
      %p86 = por %p84, %p85
      %p88 = scmp.ne.s32.totalorder %s71, %s87
      %p89 = scmp.eq.s32.totalorder %s21, 0
      %p90 = por %p88, %p89
      %s91 = ssub.s32 %s15, %s22
      %p92 = scmp.eq.s32.totalorder %s91, 0
      %s94 = sadd.s32 %s93, 1
      %s95 = scalar_select %p92, %s93, %s94
      %p98 = pneg %p92
      %p99 = scmp.eq.s32.totalorder %s15, 1
      %p100 = por %p98, %p99
      %p101 = scmp.ne.s32.totalorder %s93, %s96
      %p102 = scmp.eq.s32.totalorder %s15, 0
      %p103 = por %p101, %p102
      %p104 = scmp.ne.s32.totalorder %s93, %s96
      %p105 = scmp.eq.s32.totalorder %s20, 1
      %p106 = por %p104, %p105
      %p107 = scmp.ne.s32.totalorder %s96, %s97
      %p108 = scmp.eq.s32.totalorder %s20, 0
      %p109 = por %p107, %p108
      %p110 = scmp.ne.s32.totalorder %s96, %s97
      %p111 = scmp.eq.s32.totalorder %s21, 1
      %p112 = por %p110, %p111
      %p114 = scmp.ne.s32.totalorder %s97, %s113
      %p115 = scmp.eq.s32.totalorder %s21, 0
      %p116 = por %p114, %p115
      %p117 = scmp.le.s32.totalorder 1, %s15
      %p118 = scmp.lt.s32.totalorder %s15, 3
      %p119 = pnand %p117, %p118
      %p120 = pneg %p119
      // Predicated region
      $region9: #{tpu_custom_call.1} parent=5 // pred_check
        _
      $region10: #{tpu_custom_call.1} parent=5 // pred_check_branch
        %122 = sbr.rel (%p119) target = $region12
      $region11: #{tpu_custom_call.1} parent=5 // pred_region
        %s123 = ssub.s32 %s15, 1
        // Predicated region
        $region13: #{tpu_custom_call.1} parent=11 // pred_check
          %p124 = pneg %p36
        $region14: #{tpu_custom_call.1} parent=11 // pred_check_branch
          %126 = sbr.rel (%p124) target = $region16
        $region15: #{tpu_custom_call.1} parent=11 // pred_region
          _
        $region16: #{tpu_custom_call.1} parent=11 // pred_fallthru
          _
        // Predicated region
        $region17: #{tpu_custom_call.1} parent=11 // pred_check
          %p127 = pneg %p57
        $region18: #{tpu_custom_call.1} parent=11 // pred_check_branch
          %129 = sbr.rel (%p127) target = $region20
        $region19: #{tpu_custom_call.1} parent=11 // pred_region
          _
        $region20: #{tpu_custom_call.1} parent=11 // pred_fallthru
          _
      $region12: #{tpu_custom_call.1} parent=5 // pred_fallthru
        _
      %p130 = scmp.lt.s32.totalorder %s15, 2
      // Predicated region
      $region21: #{tpu_custom_call.1} parent=5 // pred_check
        %p131 = pneg %p130
      $region22: #{tpu_custom_call.1} parent=5 // pred_check_branch
        %133 = sbr.rel (%p131) target = $region24
      $region23: #{tpu_custom_call.1} parent=5 // pred_region
        // Predicated region
        $region25: #{tpu_custom_call.1} parent=23 // pred_check
          %p134 = pneg %p77
        $region26: #{tpu_custom_call.1} parent=23 // pred_check_branch
          %136 = sbr.rel (%p134) target = $region28
        $region27: #{tpu_custom_call.1} parent=23 // pred_region
          %s137 = sand.u32 %s67, 1
          %s138 = scalar_lea.sflag [#allocation3], %s137
          %s139 = sand.u32 %s67, 1
          %s140 = smul.addr %s139, 64
          %s141 = scalar_lea.vmem [#allocation2], %s140
          %s142 = smul.u32 4, %s15
          %s144 = ssub.s32 1024, 1024
          %145 = vsyncadd %s138, %s144
          %s146 = smul.addr %s142, 2
          %s147 = smul.addr %s146, 128
          %s148 = scalar_lea.hbm %s2, %s147
          %s149 = sshll.u32 %s141, 4
          %s150 = int_to_ptr.vmem [resolvable:$true] %s149
          %155 = dma.hbm_to_vmem [thread:$0]  %s148, 1024, %s150, %s138, 128, 128, 8
        $region28: #{tpu_custom_call.1} parent=23 // pred_fallthru
          _
      $region24: #{tpu_custom_call.1} parent=5 // pred_fallthru
        _
      %p156 = scmp.le.s32.totalorder 1, %s15
      %p157 = scmp.lt.s32.totalorder %s15, 3
      %p158 = pnand %p156, %p157
      %p159 = pneg %p158
      // Predicated region
      $region29: #{tpu_custom_call.1} parent=5 // pred_check
        _
      $region30: #{tpu_custom_call.1} parent=5 // pred_check_branch
        %161 = sbr.rel (%p158) target = $region32
      $region31: #{tpu_custom_call.1} parent=5 // pred_region
        %s162 = ssub.s32 %s15, 1
        %s163 = sand.u32 %s70, 1
        %s164 = scalar_lea.sflag [#allocation3], %s163
        %s165 = sand.u32 %s70, 1
        %s166 = smul.addr %s165, 64
        %s167 = scalar_lea.vmem [#allocation2], %s166
        // Predicated region
        $region33: #{tpu_custom_call.1} parent=31 // pred_check
          %p168 = pneg %p83
        $region34: #{tpu_custom_call.1} parent=31 // pred_check_branch
          %170 = sbr.rel (%p168) target = $region36
        $region35: #{tpu_custom_call.1} parent=31 // pred_region
          %171 = dma.done %s164, 1024
        $region36: #{tpu_custom_call.1} parent=31 // pred_fallthru
          _
        %p172 = pneg %p36
        %p173 = pneg %p33
        %p174 = pneg %p57
        %p175 = pneg %p54
        %s176 = sand.u32 %s70, 1
        %s177 = scalar_lea.sflag [#allocation3], %s176
        %s178 = sand.u32 %s70, 1
        %s179 = smul.addr %s178, 64
        %s180 = scalar_lea.vmem [#allocation2], %s179
        %p181 = pneg %p83
        %p182 = pneg %p80
        %p183 = pneg %p109
        %p184 = pneg %p106
        %s185 = sand.u32 %s96, 1
        %s186 = scalar_lea.sflag [#allocation4], %s185
        %s187 = sand.u32 %s96, 1
        %s188 = smul.addr %s187, 128
        %s189 = scalar_lea.vmem [#allocation5], %s188
        %s190 = smul.u32 4, %s20
        %s191 = smul.u32 4, %s20
        %v192 = vld [vmem:[%s167] sm:$0xff]
        %v193 = vld [vmem:[%s167 + $0x8] sm:$0xff]
        %v194 = vld [vmem:[%s167 + $0x10] sm:$0xff]
        %v195 = vld [vmem:[%s167 + $0x18] sm:$0xff]
        %v196 = vld [vmem:[%s167 + $0x20] sm:$0xff]
        %v197 = vld [vmem:[%s167 + $0x28] sm:$0xff]
        %v198 = vld [vmem:[%s167 + $0x30] sm:$0xff]
        %v199 = vld [vmem:[%s167 + $0x38] sm:$0xff]
        %v200 = vld [vmem:[%s0] sm:$0xff]
        %v201 = vld [vmem:[%s0 + $0x8] sm:$0xff]
        %v202 = vld [vmem:[%s0 + $0x10] sm:$0xff]
        %v203 = vld [vmem:[%s0 + $0x18] sm:$0xff]
        %vm204 = vcmask 130048
        %v206 = vsel %vm204, %v200, 0
        %v209 = vsel %vm204, %v201, 0
        %v212 = vsel %vm204, %v202, 0
        %v215 = vsel %vm204, %v203, 0
        %217 = vmatprep.subr.mxu0 0.0
        %218 = vmatpush1.msra.mxu0 0.0
        %219 = vmatprep.subr.mxu0 0.0
        %220 = vmatpush1.msra.mxu0 0.0
        %221 = vmatprep.subr.mxu0 0.0
        %222 = vmatpush1.msra.mxu0 0.0
        %223 = vmatprep.subr.mxu0 0.0
        %224 = vmatpush1.msra.mxu0 0.0
        %225 = vmatprep.subr.mxu0 0.0
        %226 = vmatpush1.msra.mxu0 0.0
        %227 = vmatprep.subr.mxu0 0.0
        %228 = vmatpush1.msra.mxu0 0.0
        %229 = vmatprep.subr.mxu0 0.0
        %230 = vmatpush1.msra.mxu0 0.0
        %231 = vmatprep.subr.mxu0 0.0
        %232 = vmatpush1.msra.mxu0 0.0
        %233 = vmatprep.subr.mxu0 0.0
        %234 = vmatpush1.msra.mxu0 0.0
        %235 = vmatprep.subr.mxu0 0.0
        %236 = vmatpush1.msra.mxu0 0.0
        %237 = vmatprep.subr.mxu0 0.0
        %238 = vmatpush1.msra.mxu0 0.0
        %239 = vmatprep.subr.mxu0 0.0
        %240 = vmatpush1.msra.mxu0 0.0
        %241 = vmatprep.subr.mxu0 0.0
        %242 = vmatpush1.msra.mxu0 0.0
        %243 = vmatprep.subr.mxu0 0.0
        %244 = vmatpush1.msra.mxu0 0.0
        %245 = vmatprep.subr.mxu0 0.0
        %246 = vmatpush1.msra.mxu0 %v193
        %247 = vmatprep.subr.mxu0 0.0
        %248 = vmatpush1.msra.mxu0 %v192
        %249 = vmatprep.subr.mxu0 0.0
        %250 = vmatpush2.msra.mxu0 0.0
        %251 = vmatprep.subr.mxu0 0.0
        %252 = vmatpush2.msra.mxu0 0.0
        %253 = vmatprep.subr.mxu0 0.0
        %254 = vmatpush2.msra.mxu0 0.0
        %255 = vmatprep.subr.mxu0 0.0
        %256 = vmatpush2.msra.mxu0 0.0
        %257 = vmatprep.subr.mxu0 0.0
        %258 = vmatpush2.msra.mxu0 0.0
        %259 = vmatprep.subr.mxu0 0.0
        %260 = vmatpush2.msra.mxu0 0.0
        %261 = vmatprep.subr.mxu0 0.0
        %262 = vmatpush2.msra.mxu0 0.0
        %263 = vmatprep.subr.mxu0 0.0
        %264 = vmatpush2.msra.mxu0 0.0
        %265 = vmatprep.subr.mxu0 0.0
        %266 = vmatpush2.msra.mxu0 0.0
        %267 = vmatprep.subr.mxu0 0.0
        %268 = vmatpush2.msra.mxu0 0.0
        %269 = vmatprep.subr.mxu0 0.0
        %270 = vmatpush2.msra.mxu0 0.0
        %271 = vmatprep.subr.mxu0 0.0
        %272 = vmatpush2.msra.mxu0 0.0
        %273 = vmatprep.subr.mxu0 0.0
        %274 = vmatpush2.msra.mxu0 0.0
        %275 = vmatprep.subr.mxu0 0.0
        %276 = vmatpush2.msra.mxu0 0.0
        %277 = vmatprep.subr.mxu0 0.0
        %278 = vmatpush2.msra.mxu0 0.0
        %279 = vmatprep.subr.mxu0 0.0
        %280 = vmatpush2.msra.mxu0 0.0
        %281 = vmatprep.mubr.f32.mxu0 0.0
        %282 = vmatmul.mubr.f32.gmra.mxu0 %v206
        %v283 = vpop.f32.mrf.mxu0
        %v284 = vadd.f32 0.0, %v283
        %v285 = vpop.f32.mrf.mxu0
        %286 = vmatprep.mubr.f32.mxu0 0.0
        %287 = vmatmul.mubr.f32.gmra.mxu0 %v209
        %v288 = vpop.f32.mrf.mxu0
        %v289 = vadd.f32 0.0, %v288
        %v290 = vpop.f32.mrf.mxu0
        %291 = vmatprep.mubr.f32.mxu0 0.0
        %292 = vmatmul.mubr.f32.gmra.mxu0 %v212
        %v293 = vpop.f32.mrf.mxu0
        %v294 = vadd.f32 0.0, %v293
        %v295 = vpop.f32.mrf.mxu0
        %296 = vmatprep.mubr.f32.mxu0 0.0
        %297 = vmatmul.mubr.f32.gmra.mxu0 %v215
        %v298 = vpop.f32.mrf.mxu0
        %v299 = vadd.f32 0.0, %v298
        %v300 = vpop.f32.mrf.mxu0
        %301 = vdwg.mxu0
        %302 = vmatprep.subr.mxu0 0.0
        %303 = vmatpush1.msra.mxu0 0.0
        %304 = vmatprep.subr.mxu0 0.0
        %305 = vmatpush1.msra.mxu0 0.0
        %306 = vmatprep.subr.mxu0 0.0
        %307 = vmatpush1.msra.mxu0 0.0
        %308 = vmatprep.subr.mxu0 0.0
        %309 = vmatpush1.msra.mxu0 0.0
        %310 = vmatprep.subr.mxu0 0.0
        %311 = vmatpush1.msra.mxu0 0.0
        %312 = vmatprep.subr.mxu0 0.0
        %313 = vmatpush1.msra.mxu0 0.0
        %314 = vmatprep.subr.mxu0 0.0
        %315 = vmatpush1.msra.mxu0 0.0
        %316 = vmatprep.subr.mxu0 0.0
        %317 = vmatpush1.msra.mxu0 0.0
        %318 = vmatprep.subr.mxu0 0.0
        %319 = vmatpush1.msra.mxu0 0.0
        %320 = vmatprep.subr.mxu0 0.0
        %321 = vmatpush1.msra.mxu0 0.0
        %322 = vmatprep.subr.mxu0 0.0
        %323 = vmatpush1.msra.mxu0 0.0
        %324 = vmatprep.subr.mxu0 0.0
        %325 = vmatpush1.msra.mxu0 0.0
        %326 = vmatprep.subr.mxu0 0.0
        %327 = vmatpush1.msra.mxu0 0.0
        %328 = vmatprep.subr.mxu0 0.0
        %329 = vmatpush1.msra.mxu0 0.0
        %330 = vmatprep.subr.mxu0 0.0
        %331 = vmatpush1.msra.mxu0 %v195
        %332 = vmatprep.subr.mxu0 0.0
        %333 = vmatpush1.msra.mxu0 %v194
        %334 = vmatprep.subr.mxu0 0.0
        %335 = vmatpush2.msra.mxu0 0.0
        %336 = vmatprep.subr.mxu0 0.0
        %337 = vmatpush2.msra.mxu0 0.0
        %338 = vmatprep.subr.mxu0 0.0
        %339 = vmatpush2.msra.mxu0 0.0
        %340 = vmatprep.subr.mxu0 0.0
        %341 = vmatpush2.msra.mxu0 0.0
        %342 = vmatprep.subr.mxu0 0.0
        %343 = vmatpush2.msra.mxu0 0.0
        %344 = vmatprep.subr.mxu0 0.0
        %345 = vmatpush2.msra.mxu0 0.0
        %346 = vmatprep.subr.mxu0 0.0
        %347 = vmatpush2.msra.mxu0 0.0
        %348 = vmatprep.subr.mxu0 0.0
        %349 = vmatpush2.msra.mxu0 0.0
        %350 = vmatprep.subr.mxu0 0.0
        %351 = vmatpush2.msra.mxu0 0.0
        %352 = vmatprep.subr.mxu0 0.0
        %353 = vmatpush2.msra.mxu0 0.0
        %354 = vmatprep.subr.mxu0 0.0
        %355 = vmatpush2.msra.mxu0 0.0
        %356 = vmatprep.subr.mxu0 0.0
        %357 = vmatpush2.msra.mxu0 0.0
        %358 = vmatprep.subr.mxu0 0.0
        %359 = vmatpush2.msra.mxu0 0.0
        %360 = vmatprep.subr.mxu0 0.0
        %361 = vmatpush2.msra.mxu0 0.0
        %362 = vmatprep.subr.mxu0 0.0
        %363 = vmatpush2.msra.mxu0 0.0
        %364 = vmatprep.subr.mxu0 0.0
        %365 = vmatpush2.msra.mxu0 0.0
        %366 = vmatprep.mubr.f32.mxu0 0.0
        %367 = vmatmul.mubr.f32.gmra.mxu0 %v206
        %v368 = vpop.f32.mrf.mxu0
        %v369 = vadd.f32 0.0, %v368
        %v370 = vpop.f32.mrf.mxu0
        %371 = vmatprep.mubr.f32.mxu0 0.0
        %372 = vmatmul.mubr.f32.gmra.mxu0 %v209
        %v373 = vpop.f32.mrf.mxu0
        %v374 = vadd.f32 0.0, %v373
        %v375 = vpop.f32.mrf.mxu0
        %376 = vmatprep.mubr.f32.mxu0 0.0
        %377 = vmatmul.mubr.f32.gmra.mxu0 %v212
        %v378 = vpop.f32.mrf.mxu0
        %v379 = vadd.f32 0.0, %v378
        %v380 = vpop.f32.mrf.mxu0
        %381 = vmatprep.mubr.f32.mxu0 0.0
        %382 = vmatmul.mubr.f32.gmra.mxu0 %v215
        %v383 = vpop.f32.mrf.mxu0
        %v384 = vadd.f32 0.0, %v383
        %v385 = vpop.f32.mrf.mxu0
        %386 = vdwg.mxu0
        %387 = vmatprep.subr.mxu0 0.0
        %388 = vmatpush1.msra.mxu0 0.0
        %389 = vmatprep.subr.mxu0 0.0
        %390 = vmatpush1.msra.mxu0 0.0
        %391 = vmatprep.subr.mxu0 0.0
        %392 = vmatpush1.msra.mxu0 0.0
        %393 = vmatprep.subr.mxu0 0.0
        %394 = vmatpush1.msra.mxu0 0.0
        %395 = vmatprep.subr.mxu0 0.0
        %396 = vmatpush1.msra.mxu0 0.0
        %397 = vmatprep.subr.mxu0 0.0
        %398 = vmatpush1.msra.mxu0 0.0
        %399 = vmatprep.subr.mxu0 0.0
        %400 = vmatpush1.msra.mxu0 0.0
        %401 = vmatprep.subr.mxu0 0.0
        %402 = vmatpush1.msra.mxu0 0.0
        %403 = vmatprep.subr.mxu0 0.0
        %404 = vmatpush1.msra.mxu0 0.0
        %405 = vmatprep.subr.mxu0 0.0
        %406 = vmatpush1.msra.mxu0 0.0
        %407 = vmatprep.subr.mxu0 0.0
        %408 = vmatpush1.msra.mxu0 0.0
        %409 = vmatprep.subr.mxu0 0.0
        %410 = vmatpush1.msra.mxu0 0.0
        %411 = vmatprep.subr.mxu0 0.0
        %412 = vmatpush1.msra.mxu0 0.0
        %413 = vmatprep.subr.mxu0 0.0
        %414 = vmatpush1.msra.mxu0 0.0
        %415 = vmatprep.subr.mxu0 0.0
        %416 = vmatpush1.msra.mxu0 %v197
        %417 = vmatprep.subr.mxu0 0.0
        %418 = vmatpush1.msra.mxu0 %v196
        %419 = vmatprep.subr.mxu0 0.0
        %420 = vmatpush2.msra.mxu0 0.0
        %421 = vmatprep.subr.mxu0 0.0
        %422 = vmatpush2.msra.mxu0 0.0
        %423 = vmatprep.subr.mxu0 0.0
        %424 = vmatpush2.msra.mxu0 0.0
        %425 = vmatprep.subr.mxu0 0.0
        %426 = vmatpush2.msra.mxu0 0.0
        %427 = vmatprep.subr.mxu0 0.0
        %428 = vmatpush2.msra.mxu0 0.0
        %429 = vmatprep.subr.mxu0 0.0
        %430 = vmatpush2.msra.mxu0 0.0
        %431 = vmatprep.subr.mxu0 0.0
        %432 = vmatpush2.msra.mxu0 0.0
        %433 = vmatprep.subr.mxu0 0.0
        %434 = vmatpush2.msra.mxu0 0.0
        %435 = vmatprep.subr.mxu0 0.0
        %436 = vmatpush2.msra.mxu0 0.0
        %437 = vmatprep.subr.mxu0 0.0
        %438 = vmatpush2.msra.mxu0 0.0
        %439 = vmatprep.subr.mxu0 0.0
        %440 = vmatpush2.msra.mxu0 0.0
        %441 = vmatprep.subr.mxu0 0.0
        %442 = vmatpush2.msra.mxu0 0.0
        %443 = vmatprep.subr.mxu0 0.0
        %444 = vmatpush2.msra.mxu0 0.0
        %445 = vmatprep.subr.mxu0 0.0
        %446 = vmatpush2.msra.mxu0 0.0
        %447 = vmatprep.subr.mxu0 0.0
        %448 = vmatpush2.msra.mxu0 0.0
        %449 = vmatprep.subr.mxu0 0.0
        %450 = vmatpush2.msra.mxu0 0.0
        %451 = vmatprep.mubr.f32.mxu0 0.0
        %452 = vmatmul.mubr.f32.gmra.mxu0 %v206
        %v453 = vpop.f32.mrf.mxu0
        %v454 = vadd.f32 0.0, %v453
        %v455 = vpop.f32.mrf.mxu0
        %456 = vmatprep.mubr.f32.mxu0 0.0
        %457 = vmatmul.mubr.f32.gmra.mxu0 %v209
        %v458 = vpop.f32.mrf.mxu0
        %v459 = vadd.f32 0.0, %v458
        %v460 = vpop.f32.mrf.mxu0
        %461 = vmatprep.mubr.f32.mxu0 0.0
        %462 = vmatmul.mubr.f32.gmra.mxu0 %v212
        %v463 = vpop.f32.mrf.mxu0
        %v464 = vadd.f32 0.0, %v463
        %v465 = vpop.f32.mrf.mxu0
        %466 = vmatprep.mubr.f32.mxu0 0.0
        %467 = vmatmul.mubr.f32.gmra.mxu0 %v215
        %v468 = vpop.f32.mrf.mxu0
        %v469 = vadd.f32 0.0, %v468
        %v470 = vpop.f32.mrf.mxu0
        %471 = vdwg.mxu0
        %472 = vmatprep.subr.mxu0 0.0
        %473 = vmatpush1.msra.mxu0 0.0
        %474 = vmatprep.subr.mxu0 0.0
        %475 = vmatpush1.msra.mxu0 0.0
        %476 = vmatprep.subr.mxu0 0.0
        %477 = vmatpush1.msra.mxu0 0.0
        %478 = vmatprep.subr.mxu0 0.0
        %479 = vmatpush1.msra.mxu0 0.0
        %480 = vmatprep.subr.mxu0 0.0
        %481 = vmatpush1.msra.mxu0 0.0
        %482 = vmatprep.subr.mxu0 0.0
        %483 = vmatpush1.msra.mxu0 0.0
        %484 = vmatprep.subr.mxu0 0.0
        %485 = vmatpush1.msra.mxu0 0.0
        %486 = vmatprep.subr.mxu0 0.0
        %487 = vmatpush1.msra.mxu0 0.0
        %488 = vmatprep.subr.mxu0 0.0
        %489 = vmatpush1.msra.mxu0 0.0
        %490 = vmatprep.subr.mxu0 0.0
        %491 = vmatpush1.msra.mxu0 0.0
        %492 = vmatprep.subr.mxu0 0.0
        %493 = vmatpush1.msra.mxu0 0.0
        %494 = vmatprep.subr.mxu0 0.0
        %495 = vmatpush1.msra.mxu0 0.0
        %496 = vmatprep.subr.mxu0 0.0
        %497 = vmatpush1.msra.mxu0 0.0
        %498 = vmatprep.subr.mxu0 0.0
        %499 = vmatpush1.msra.mxu0 0.0
        %500 = vmatprep.subr.mxu0 0.0
        %501 = vmatpush1.msra.mxu0 %v199
        %502 = vmatprep.subr.mxu0 0.0
        %503 = vmatpush1.msra.mxu0 %v198
        %504 = vmatprep.subr.mxu0 0.0
        %505 = vmatpush2.msra.mxu0 0.0
        %506 = vmatprep.subr.mxu0 0.0
        %507 = vmatpush2.msra.mxu0 0.0
        %508 = vmatprep.subr.mxu0 0.0
        %509 = vmatpush2.msra.mxu0 0.0
        %510 = vmatprep.subr.mxu0 0.0
        %511 = vmatpush2.msra.mxu0 0.0
        %512 = vmatprep.subr.mxu0 0.0
        %513 = vmatpush2.msra.mxu0 0.0
        %514 = vmatprep.subr.mxu0 0.0
        %515 = vmatpush2.msra.mxu0 0.0
        %516 = vmatprep.subr.mxu0 0.0
        %517 = vmatpush2.msra.mxu0 0.0
        %518 = vmatprep.subr.mxu0 0.0
        %519 = vmatpush2.msra.mxu0 0.0
        %520 = vmatprep.subr.mxu0 0.0
        %521 = vmatpush2.msra.mxu0 0.0
        %522 = vmatprep.subr.mxu0 0.0
        %523 = vmatpush2.msra.mxu0 0.0
        %524 = vmatprep.subr.mxu0 0.0
        %525 = vmatpush2.msra.mxu0 0.0
        %526 = vmatprep.subr.mxu0 0.0
        %527 = vmatpush2.msra.mxu0 0.0
        %528 = vmatprep.subr.mxu0 0.0
        %529 = vmatpush2.msra.mxu0 0.0
        %530 = vmatprep.subr.mxu0 0.0
        %531 = vmatpush2.msra.mxu0 0.0
        %532 = vmatprep.subr.mxu0 0.0
        %533 = vmatpush2.msra.mxu0 0.0
        %534 = vmatprep.subr.mxu0 0.0
        %535 = vmatpush2.msra.mxu0 0.0
        %536 = vmatprep.mubr.f32.mxu0 0.0
        %537 = vmatmul.mubr.f32.gmra.mxu0 %v206
        %v538 = vpop.f32.mrf.mxu0
        %v539 = vadd.f32 0.0, %v538
        %v540 = vpop.f32.mrf.mxu0
        %541 = vmatprep.mubr.f32.mxu0 0.0
        %542 = vmatmul.mubr.f32.gmra.mxu0 %v209
        %v543 = vpop.f32.mrf.mxu0
        %v544 = vadd.f32 0.0, %v543
        %v545 = vpop.f32.mrf.mxu0
        %546 = vmatprep.mubr.f32.mxu0 0.0
        %547 = vmatmul.mubr.f32.gmra.mxu0 %v212
        %v548 = vpop.f32.mrf.mxu0
        %v549 = vadd.f32 0.0, %v548
        %v550 = vpop.f32.mrf.mxu0
        %551 = vmatprep.mubr.f32.mxu0 0.0
        %552 = vmatmul.mubr.f32.gmra.mxu0 %v215
        %v553 = vpop.f32.mrf.mxu0
        %v554 = vadd.f32 0.0, %v553
        %v555 = vpop.f32.mrf.mxu0
        %556 = vdwg.mxu0
        %v557 = vld [vmem:[%s1] sm:$0xff]
        %v558 = vld [vmem:[%s1 + $0x8] sm:$0xff]
        %v560 = vsel %vm204, %v284, 0
        %v563 = vsel %vm204, %v289, 0
        %v566 = vsel %vm204, %v294, 0
        %v569 = vsel %vm204, %v299, 0
        %v572 = vsel %vm204, %v369, 0
        %v575 = vsel %vm204, %v374, 0
        %v578 = vsel %vm204, %v379, 0
        %v581 = vsel %vm204, %v384, 0
        %v584 = vsel %vm204, %v454, 0
        %v587 = vsel %vm204, %v459, 0
        %v590 = vsel %vm204, %v464, 0
        %v593 = vsel %vm204, %v469, 0
        %v596 = vsel %vm204, %v539, 0
        %v599 = vsel %vm204, %v544, 0
        %v602 = vsel %vm204, %v549, 0
        %v605 = vsel %vm204, %v554, 0
        %607 = vmatprep.subr.mxu0 0.0
        %608 = vmatpush1.msra.mxu0 0.0
        %609 = vmatprep.subr.mxu0 0.0
        %610 = vmatpush1.msra.mxu0 0.0
        %611 = vmatprep.subr.mxu0 0.0
        %612 = vmatpush1.msra.mxu0 0.0
        %613 = vmatprep.subr.mxu0 0.0
        %614 = vmatpush1.msra.mxu0 0.0
        %615 = vmatprep.subr.mxu0 0.0
        %616 = vmatpush1.msra.mxu0 0.0
        %617 = vmatprep.subr.mxu0 0.0
        %618 = vmatpush1.msra.mxu0 0.0
        %619 = vmatprep.subr.mxu0 0.0
        %620 = vmatpush1.msra.mxu0 0.0
        %621 = vmatprep.subr.mxu0 0.0
        %622 = vmatpush1.msra.mxu0 0.0
        %623 = vmatprep.subr.mxu0 0.0
        %624 = vmatpush1.msra.mxu0 0.0
        %625 = vmatprep.subr.mxu0 0.0
        %626 = vmatpush1.msra.mxu0 0.0
        %627 = vmatprep.subr.mxu0 0.0
        %628 = vmatpush1.msra.mxu0 0.0
        %629 = vmatprep.subr.mxu0 0.0
        %630 = vmatpush1.msra.mxu0 0.0
        %631 = vmatprep.subr.mxu0 0.0
        %632 = vmatpush1.msra.mxu0 0.0
        %633 = vmatprep.subr.mxu0 0.0
        %634 = vmatpush1.msra.mxu0 0.0
        %635 = vmatprep.subr.mxu0 0.0
        %636 = vmatpush1.msra.mxu0 %v558
        %637 = vmatprep.subr.mxu0 0.0
        %638 = vmatpush1.msra.mxu0 %v557
        %639 = vmatprep.subr.mxu0 0.0
        %640 = vmatpush2.msra.mxu0 0.0
        %641 = vmatprep.subr.mxu0 0.0
        %642 = vmatpush2.msra.mxu0 0.0
        %643 = vmatprep.subr.mxu0 0.0
        %644 = vmatpush2.msra.mxu0 0.0
        %645 = vmatprep.subr.mxu0 0.0
        %646 = vmatpush2.msra.mxu0 0.0
        %647 = vmatprep.subr.mxu0 0.0
        %648 = vmatpush2.msra.mxu0 0.0
        %649 = vmatprep.subr.mxu0 0.0
        %650 = vmatpush2.msra.mxu0 0.0
        %651 = vmatprep.subr.mxu0 0.0
        %652 = vmatpush2.msra.mxu0 0.0
        %653 = vmatprep.subr.mxu0 0.0
        %654 = vmatpush2.msra.mxu0 0.0
        %655 = vmatprep.subr.mxu0 0.0
        %656 = vmatpush2.msra.mxu0 0.0
        %657 = vmatprep.subr.mxu0 0.0
        %658 = vmatpush2.msra.mxu0 0.0
        %659 = vmatprep.subr.mxu0 0.0
        %660 = vmatpush2.msra.mxu0 0.0
        %661 = vmatprep.subr.mxu0 0.0
        %662 = vmatpush2.msra.mxu0 0.0
        %663 = vmatprep.subr.mxu0 0.0
        %664 = vmatpush2.msra.mxu0 0.0
        %665 = vmatprep.subr.mxu0 0.0
        %666 = vmatpush2.msra.mxu0 0.0
        %667 = vmatprep.subr.mxu0 0.0
        %668 = vmatpush2.msra.mxu0 0.0
        %669 = vmatprep.subr.mxu0 0.0
        %670 = vmatpush2.msra.mxu0 0.0
        %671 = vmatprep.mubr.f32.mxu0 0.0
        %672 = vmatmul.mubr.f32.gmra.mxu0 %v560
        %v673 = vpop.f32.mrf.mxu0
        %v674 = vadd.f32 0.0, %v673
        %v675 = vpop.f32.mrf.mxu0
        %676 = vmatprep.mubr.f32.mxu0 0.0
        %677 = vmatmul.mubr.f32.gmra.mxu0 %v563
        %v678 = vpop.f32.mrf.mxu0
        %v679 = vadd.f32 0.0, %v678
        %v680 = vpop.f32.mrf.mxu0
        %681 = vmatprep.mubr.f32.mxu0 0.0
        %682 = vmatmul.mubr.f32.gmra.mxu0 %v566
        %v683 = vpop.f32.mrf.mxu0
        %v684 = vadd.f32 0.0, %v683
        %v685 = vpop.f32.mrf.mxu0
        %686 = vmatprep.mubr.f32.mxu0 0.0
        %687 = vmatmul.mubr.f32.gmra.mxu0 %v569
        %v688 = vpop.f32.mrf.mxu0
        %v689 = vadd.f32 0.0, %v688
        %v690 = vpop.f32.mrf.mxu0
        %691 = vmatprep.mubr.f32.mxu0 0.0
        %692 = vmatmul.mubr.f32.gmra.mxu0 %v572
        %v693 = vpop.f32.mrf.mxu0
        %v694 = vadd.f32 0.0, %v693
        %v695 = vpop.f32.mrf.mxu0
        %696 = vmatprep.mubr.f32.mxu0 0.0
        %697 = vmatmul.mubr.f32.gmra.mxu0 %v575
        %v698 = vpop.f32.mrf.mxu0
        %v699 = vadd.f32 0.0, %v698
        %v700 = vpop.f32.mrf.mxu0
        %701 = vmatprep.mubr.f32.mxu0 0.0
        %702 = vmatmul.mubr.f32.gmra.mxu0 %v578
        %v703 = vpop.f32.mrf.mxu0
        %v704 = vadd.f32 0.0, %v703
        %v705 = vpop.f32.mrf.mxu0
        %706 = vmatprep.mubr.f32.mxu0 0.0
        %707 = vmatmul.mubr.f32.gmra.mxu0 %v581
        %v708 = vpop.f32.mrf.mxu0
        %v709 = vadd.f32 0.0, %v708
        %v710 = vpop.f32.mrf.mxu0
        %711 = vmatprep.mubr.f32.mxu0 0.0
        %712 = vmatmul.mubr.f32.gmra.mxu0 %v584
        %v713 = vpop.f32.mrf.mxu0
        %v714 = vadd.f32 0.0, %v713
        %v715 = vpop.f32.mrf.mxu0
        %716 = vmatprep.mubr.f32.mxu0 0.0
        %717 = vmatmul.mubr.f32.gmra.mxu0 %v587
        %v718 = vpop.f32.mrf.mxu0
        %v719 = vadd.f32 0.0, %v718
        %v720 = vpop.f32.mrf.mxu0
        %721 = vmatprep.mubr.f32.mxu0 0.0
        %722 = vmatmul.mubr.f32.gmra.mxu0 %v590
        %v723 = vpop.f32.mrf.mxu0
        %v724 = vadd.f32 0.0, %v723
        %v725 = vpop.f32.mrf.mxu0
        %726 = vmatprep.mubr.f32.mxu0 0.0
        %727 = vmatmul.mubr.f32.gmra.mxu0 %v593
        %v728 = vpop.f32.mrf.mxu0
        %v729 = vadd.f32 0.0, %v728
        %v730 = vpop.f32.mrf.mxu0
        %731 = vmatprep.mubr.f32.mxu0 0.0
        %732 = vmatmul.mubr.f32.gmra.mxu0 %v596
        %v733 = vpop.f32.mrf.mxu0
        %v734 = vadd.f32 0.0, %v733
        %v735 = vpop.f32.mrf.mxu0
        %736 = vmatprep.mubr.f32.mxu0 0.0
        %737 = vmatmul.mubr.f32.gmra.mxu0 %v599
        %v738 = vpop.f32.mrf.mxu0
        %v739 = vadd.f32 0.0, %v738
        %v740 = vpop.f32.mrf.mxu0
        %741 = vmatprep.mubr.f32.mxu0 0.0
        %742 = vmatmul.mubr.f32.gmra.mxu0 %v602
        %v743 = vpop.f32.mrf.mxu0
        %v744 = vadd.f32 0.0, %v743
        %v745 = vpop.f32.mrf.mxu0
        %746 = vmatprep.mubr.f32.mxu0 0.0
        %747 = vmatmul.mubr.f32.gmra.mxu0 %v605
        %v748 = vpop.f32.mrf.mxu0
        %v749 = vadd.f32 0.0, %v748
        %v750 = vpop.f32.mrf.mxu0
        %751 = vdwg.mxu0
        %vm752 = vcmask 261120
        %753 = vst.msk [vmem:[%s189] sm:$0xff] %vm752, %v674
        %754 = vst.msk [vmem:[%s189 + $0x8] sm:$0xff] %vm752, %v679
        %755 = vst.msk [vmem:[%s189 + $0x10] sm:$0xff] %vm752, %v684
        %756 = vst.msk [vmem:[%s189 + $0x18] sm:$0xff] %vm752, %v689
        %757 = vst.msk [vmem:[%s189 + $0x20] sm:$0xff] %vm752, %v694
        %758 = vst.msk [vmem:[%s189 + $0x28] sm:$0xff] %vm752, %v699
        %759 = vst.msk [vmem:[%s189 + $0x30] sm:$0xff] %vm752, %v704
        %760 = vst.msk [vmem:[%s189 + $0x38] sm:$0xff] %vm752, %v709
        %761 = vst.msk [vmem:[%s189 + $0x40] sm:$0xff] %vm752, %v714
        %762 = vst.msk [vmem:[%s189 + $0x48] sm:$0xff] %vm752, %v719
        %763 = vst.msk [vmem:[%s189 + $0x50] sm:$0xff] %vm752, %v724
        %764 = vst.msk [vmem:[%s189 + $0x58] sm:$0xff] %vm752, %v729
        %765 = vst.msk [vmem:[%s189 + $0x60] sm:$0xff] %vm752, %v734
        %766 = vst.msk [vmem:[%s189 + $0x68] sm:$0xff] %vm752, %v739
        %767 = vst.msk [vmem:[%s189 + $0x70] sm:$0xff] %vm752, %v744
        %768 = vst.msk [vmem:[%s189 + $0x78] sm:$0xff] %vm752, %v749
        %s769 = sand.u32 %s96, 1
        %s770 = scalar_lea.sflag [#allocation4], %s769
        %s771 = sand.u32 %s96, 1
        %s772 = smul.addr %s771, 128
        %s773 = scalar_lea.vmem [#allocation5], %s772
        // Predicated region
        $region37: #{tpu_custom_call.1} parent=31 // pred_check
          %p774 = pneg %p106
        $region38: #{tpu_custom_call.1} parent=31 // pred_check_branch
          %776 = sbr.rel (%p774) target = $region40
        $region39: #{tpu_custom_call.1} parent=31 // pred_region
          %s777 = smul.u32 4, %s20
          %s779 = ssub.s32 2048, 2048
          %780 = vsyncadd %s770, %s779
          %s781 = smul.addr %s777, 4
          %s782 = smul.addr %s781, 128
          %s783 = scalar_lea.hbm %s3, %s782
          %s784 = sshll.u32 %s773, 4
          %s785 = int_to_ptr.vmem [resolvable:$true] %s784
          %790 = dma.vmem_to_hbm [thread:$0]  %s785, 2048, %s783, %s770, 128, 128, 8
        $region40: #{tpu_custom_call.1} parent=31 // pred_fallthru
          _
      $region32: #{tpu_custom_call.1} parent=5 // pred_fallthru
        _
      %p791 = scmp.le.s32.totalorder 2, %s15
      // Predicated region
      $region41: #{tpu_custom_call.1} parent=5 // pred_check
        %p792 = pneg %p791
      $region42: #{tpu_custom_call.1} parent=5 // pred_check_branch
        %794 = sbr.rel (%p792) target = $region44
      $region43: #{tpu_custom_call.1} parent=5 // pred_region
        %s795 = ssub.s32 %s15, 2
        // Predicated region
        $region45: #{tpu_custom_call.1} parent=43 // pred_check
          %p796 = pneg %p112
        $region46: #{tpu_custom_call.1} parent=43 // pred_check_branch
          %798 = sbr.rel (%p796) target = $region48
        $region47: #{tpu_custom_call.1} parent=43 // pred_region
          %s799 = sand.u32 %s97, 1
          %s800 = scalar_lea.sflag [#allocation4], %s799
          %s801 = sand.u32 %s97, 1
          %s802 = smul.addr %s801, 128
          %s803 = scalar_lea.vmem [#allocation5], %s802
          %804 = dma.done %s800, 2048
        $region48: #{tpu_custom_call.1} parent=43 // pred_fallthru
          _
      $region44: #{tpu_custom_call.1} parent=5 // pred_fallthru
        _
    $region6: #{tpu_custom_call.1} parent=1 // loop_footer
      %s19 = sadd.s32 1, %s15
    $region7: #{tpu_custom_call.1} parent=1 // loop_footer_branch
      %14 = sbr.rel target = $region3
    $region8: #{tpu_custom_call.1} parent=1 // loop_exit
      _
    %805 = vsyncpa [#allocation3], 1
    %s806 = scalar_lea.sflag [#allocation3], 1
    %807 = vsyncpa %s806, 1
    %808 = vsyncpa [#allocation4], 1
    %s809 = scalar_lea.sflag [#allocation4], 1
    %810 = vsyncpa %s809, 1

</llo_original>
